<compile_context>
chip_gen: v7x
topology: tpu7x:2x2x1
jax: 0.10.0
libtpu: 0.0.40
codegen_flags: <defaults>
</compile_context>

<pallas_src>
import functools
import math

import jax
import jax.numpy as jnp
from jax.experimental import pallas as pl
from jax.experimental.pallas import tpu as pltpu


# ----------------------------- helpers ------------------------------------- #

def _round_up(x, m):
    return (x + m - 1) // m * m


def _pad_rows(x2d, row_tile):
    rows = x2d.shape[0]
    padded = _round_up(rows, row_tile)
    if padded != rows:
        x2d = jnp.pad(x2d, ((0, padded - rows), (0, 0)))
    return x2d, rows


# ----------------------------- kernels ------------------------------------- #

def _dense_kernel(x_ref, w_ref, b_ref, o_ref, *, activation):
    # x: (rt, K), w: (K, N), b: (1, N)
    x = x_ref[...].astype(jnp.float32)
    w = w_ref[...].astype(jnp.float32)
    b = b_ref[...].astype(jnp.float32)
    y = jnp.dot(x, w, preferred_element_type=jnp.float32) + b
    if activation == "relu":
        y = jnp.maximum(y, 0.0)
    o_ref[...] = y.astype(o_ref.dtype)


def _dense_res_ln_kernel(x_ref, w_ref, b_ref, r_ref, g_ref, be_ref, o_ref, *, eps):
    # LayerNorm( x @ W + b + residual ), biased variance, eps inside rsqrt.
    x = x_ref[...].astype(jnp.float32)
    w = w_ref[...].astype(jnp.float32)
    b = b_ref[...].astype(jnp.float32)
    r = r_ref[...].astype(jnp.float32)
    y = jnp.dot(x, w, preferred_element_type=jnp.float32) + b + r
    u = jnp.mean(y, axis=-1, keepdims=True)
    d = y - u
    s = jnp.mean(d * d, axis=-1, keepdims=True)
    yn = d * jax.lax.rsqrt(s + eps)
    g = g_ref[...].astype(jnp.float32)
    be = be_ref[...].astype(jnp.float32)
    o_ref[...] = (g * yn + be).astype(o_ref.dtype)


def _ln_kernel(x_ref, g_ref, b_ref, o_ref, *, eps):
    x = x_ref[...].astype(jnp.float32)
    g = g_ref[...].astype(jnp.float32)
    b = b_ref[...].astype(jnp.float32)
    u = jnp.mean(x, axis=-1, keepdims=True)
    d = x - u
    s = jnp.mean(d * d, axis=-1, keepdims=True)
    xn = d * jax.lax.rsqrt(s + eps)
    o_ref[...] = (g * xn + b).astype(o_ref.dtype)


def _attn_kernel(q_ref, k_ref, v_ref, m_ref, o_ref, *, scale):
    # q, k, v: (S, D); m: (1, S) additive mask; o: (S, D)
    q = q_ref[...].astype(jnp.float32)
    k = k_ref[...].astype(jnp.float32)
    v = v_ref[...].astype(jnp.float32)
    m = m_ref[...].astype(jnp.float32)
    # scores[i, j] = sum_d q[i, d] * k[j, d]   (contract D without a transpose)
    s = jax.lax.dot_general(q, k, (((1,), (1,)), ((), ())),
                            preferred_element_type=jnp.float32)
    s = s * scale + m                       # (1, S) broadcasts over query rows
    s = s - jnp.max(s, axis=-1, keepdims=True)
    p = jnp.exp(s)
    p = p / jnp.sum(p, axis=-1, keepdims=True)
    o_ref[...] = jnp.dot(p, v, preferred_element_type=jnp.float32).astype(o_ref.dtype)


# ----------------------------- wrappers ------------------------------------ #

_DEFAULT_ROW_TILE = 512  # lane-dense, well inside double-buffered VMEM budget


def dense(x2d, w, b, *, activation=None, row_tile=_DEFAULT_ROW_TILE):
    rows, k = x2d.shape
    _, n = w.shape
    rt = min(row_tile, _round_up(rows, 8))
    xp, rows0 = _pad_rows(x2d, rt)
    p = xp.shape[0]
    out = pl.pallas_call(
        functools.partial(_dense_kernel, activation=activation),
        out_shape=jax.ShapeDtypeStruct((p, n), x2d.dtype),
        grid=(p // rt,),
        in_specs=[
            pl.BlockSpec((rt, k), lambda i: (i, 0)),
            pl.BlockSpec((k, n), lambda i: (0, 0)),
            pl.BlockSpec((1, n), lambda i: (0, 0)),
        ],
        out_specs=pl.BlockSpec((rt, n), lambda i: (i, 0)),
        compiler_params=pltpu.CompilerParams(dimension_semantics=("parallel",)),
    )(xp, w, b.reshape(1, n))
    return out[:rows0]


def dense_res_ln(x2d, w, b, residual2d, gamma, beta, *, eps,
                 row_tile=_DEFAULT_ROW_TILE):
    rows, k = x2d.shape
    _, n = w.shape
    rt = min(row_tile, _round_up(rows, 8))
    xp, rows0 = _pad_rows(x2d, rt)
    rp, _ = _pad_rows(residual2d, rt)
    p = xp.shape[0]
    out = pl.pallas_call(
        functools.partial(_dense_res_ln_kernel, eps=eps),
        out_shape=jax.ShapeDtypeStruct((p, n), x2d.dtype),
        grid=(p // rt,),
        in_specs=[
            pl.BlockSpec((rt, k), lambda i: (i, 0)),
            pl.BlockSpec((k, n), lambda i: (0, 0)),
            pl.BlockSpec((1, n), lambda i: (0, 0)),
            pl.BlockSpec((rt, n), lambda i: (i, 0)),
            pl.BlockSpec((1, n), lambda i: (0, 0)),
            pl.BlockSpec((1, n), lambda i: (0, 0)),
        ],
        out_specs=pl.BlockSpec((rt, n), lambda i: (i, 0)),
        compiler_params=pltpu.CompilerParams(dimension_semantics=("parallel",)),
    )(xp, w, b.reshape(1, n), rp, gamma.reshape(1, n), beta.reshape(1, n))
    return out[:rows0]


def layer_norm(x2d, gamma, beta, *, eps, row_tile=_DEFAULT_ROW_TILE):
    rows, h = x2d.shape
    rt = min(row_tile, _round_up(rows, 8))
    xp, rows0 = _pad_rows(x2d, rt)
    p = xp.shape[0]
    out = pl.pallas_call(
        functools.partial(_ln_kernel, eps=eps),
        out_shape=jax.ShapeDtypeStruct((p, h), x2d.dtype),
        grid=(p // rt,),
        in_specs=[
            pl.BlockSpec((rt, h), lambda i: (i, 0)),
            pl.BlockSpec((1, h), lambda i: (0, 0)),
            pl.BlockSpec((1, h), lambda i: (0, 0)),
        ],
        out_specs=pl.BlockSpec((rt, h), lambda i: (i, 0)),
        compiler_params=pltpu.CompilerParams(dimension_semantics=("parallel",)),
    )(xp, gamma.reshape(1, h), beta.reshape(1, h))
    return out[:rows0]


def attention(qh, kh, vh, mask_b1s, *, scale):
    # qh, kh, vh: (B, H, S, D); mask_b1s: (B, 1, S) additive
    b, h, s, d = qh.shape
    qkv_spec = pl.BlockSpec((None, None, s, d), lambda bi, hi: (bi, hi, 0, 0))
    out = pl.pallas_call(
        functools.partial(_attn_kernel, scale=scale),
        out_shape=jax.ShapeDtypeStruct((b, h, s, d), qh.dtype),
        grid=(b, h),
        in_specs=[
            qkv_spec,
            qkv_spec,
            qkv_spec,
            pl.BlockSpec((None, 1, s), lambda bi, hi: (bi, 0, 0)),
        ],
        out_specs=pl.BlockSpec((None, None, s, d), lambda bi, hi: (bi, hi, 0, 0)),
        compiler_params=pltpu.CompilerParams(
            dimension_semantics=("parallel", "parallel")),
    )(qh, kh, vh, mask_b1s)
    return out


# ------------------------ full encoder forward ------------------------------ #

def encoder_multiple_layers_forward(params, hidden_states, attention_mask):
    """fusion=False forward of Encoder_MultipleLayers (dropout = identity)."""
    b, s, hd = hidden_states.shape
    nh = params["num_heads"]
    dh = hd // nh
    scale = 1.0 / math.sqrt(dh)
    mask = attention_mask.reshape(b, 1, s).astype(jnp.float32)

    x2 = hidden_states.reshape(b * s, hd)
    for lp in params["layers"]:
        # --- SelfAttention (Q, K, V fused into a single matmul) ---
        qkv = dense(x2, lp["qkv_w"], lp["qkv_b"])            # (B*S, 3*H)
        q, k, v = qkv[:, :hd], qkv[:, hd:2 * hd], qkv[:, 2 * hd:]

        def split_heads(t):
            return t.reshape(b, s, nh, dh).transpose(0, 2, 1, 3)

        ctx = attention(split_heads(q), split_heads(k), split_heads(v),
                        mask, scale=scale)                   # (B, nh, S, dh)
        ctx2 = ctx.transpose(0, 2, 1, 3).reshape(b * s, hd)

        # --- SelfOutput: LayerNorm(dense(ctx) + residual) ---
        attn_out = dense_res_ln(ctx2, lp["o_w"], lp["o_b"], x2,
                                lp["ln1_g"], lp["ln1_b"], eps=1e-12)

        # --- Intermediate: relu(dense) ---
        inter = dense(attn_out, lp["i_w"], lp["i_b"], activation="relu")

        # --- Output: LayerNorm(dense(inter) + residual) ---
        x2 = dense_res_ln(inter, lp["out_w"], lp["out_b"], attn_out,
                          lp["ln2_g"], lp["ln2_b"], eps=1e-12)

    # --- final nn.LayerNorm([hidden]) stack (eps=1e-5) ---
    for npar in params["normlist"]:
        x2 = layer_norm(x2, npar["g"], npar["b"], eps=1e-5)

    return x2.reshape(b, s, hd)


# ------------------------ pure-JAX reference -------------------------------- #

def encoder_ref(params, hidden_states, attention_mask):
    b, s, hd = hidden_states.shape
    nh = params["num_heads"]
    dh = hd // nh
    x = hidden_states.astype(jnp.float32)
    mask = attention_mask.reshape(b, 1, 1, s).astype(jnp.float32)

    def ln(y, g, bb, eps):
        u = jnp.mean(y, -1, keepdims=True)
        var = jnp.mean((y - u) ** 2, -1, keepdims=True)
        return g * ((y - u) / jnp.sqrt(var + eps)) + bb

    for lp in params["layers"]:
        qkv = x @ lp["qkv_w"] + lp["qkv_b"]
        q, k, v = qkv[..., :hd], qkv[..., hd:2 * hd], qkv[..., 2 * hd:]

        def sh(t):
            return t.reshape(b, s, nh, dh).transpose(0, 2, 1, 3)

        sc = jnp.einsum("bhqd,bhkd->bhqk", sh(q), sh(k)) / math.sqrt(dh) + mask
        p = jax.nn.softmax(sc, axis=-1)
        ctx = jnp.einsum("bhqk,bhkd->bhqd", p, sh(v))
        ctx = ctx.transpose(0, 2, 1, 3).reshape(b, s, hd)

        attn_out = ln(ctx @ lp["o_w"] + lp["o_b"] + x, lp["ln1_g"], lp["ln1_b"], 1e-12)
        inter = jax.nn.relu(attn_out @ lp["i_w"] + lp["i_b"])
        x = ln(inter @ lp["out_w"] + lp["out_b"] + attn_out,
               lp["ln2_g"], lp["ln2_b"], 1e-12)

    for npar in params["normlist"]:
        x = ln(x, npar["g"], npar["b"], 1e-5)
    return x


# --------------------------------- main ------------------------------------- #

if __name__ == "__main__":
    # Small shapes consistent with the module: the final nn.LayerNorm([200])
    # stack forces hidden_size = 200.
    batch, seq, hidden = 2, 8, 200
    intermediate, num_heads, n_layer = 256, 4, 2

    key = jax.random.PRNGKey(0)

    def nxt():
        global key
        key, sub = jax.random.split(key)
        return sub

    layers = []
    for _ in range(n_layer):
        layers.append(dict(
            qkv_w=0.05 * jax.random.normal(nxt(), (hidden, 3 * hidden), jnp.float32),
            qkv_b=0.05 * jax.random.normal(nxt(), (3 * hidden,), jnp.float32),
            o_w=0.05 * jax.random.normal(nxt(), (hidden, hidden), jnp.float32),
            o_b=0.05 * jax.random.normal(nxt(), (hidden,), jnp.float32),
            ln1_g=jnp.ones((hidden,), jnp.float32),
            ln1_b=jnp.zeros((hidden,), jnp.float32),
            i_w=0.05 * jax.random.normal(nxt(), (hidden, intermediate), jnp.float32),
            i_b=0.05 * jax.random.normal(nxt(), (intermediate,), jnp.float32),
            out_w=0.05 * jax.random.normal(nxt(), (intermediate, hidden), jnp.float32),
            out_b=0.05 * jax.random.normal(nxt(), (hidden,), jnp.float32),
            ln2_g=jnp.ones((hidden,), jnp.float32),
            ln2_b=jnp.zeros((hidden,), jnp.float32),
        ))
    normlist = [dict(g=jnp.ones((hidden,), jnp.float32),
                     b=jnp.zeros((hidden,), jnp.float32)) for _ in range(n_layer)]
    params = dict(num_heads=num_heads, layers=layers, normlist=normlist)

    hidden_states = jax.random.normal(nxt(), (batch, seq, hidden), jnp.float32)

    # BERT-style additive attention mask (B, 1, 1, S): 0 for valid, -10000 for padded.
    lengths = jnp.array([seq, seq - 2], jnp.int32)
    valid = (jnp.arange(seq)[None, :] < lengths[:, None]).astype(jnp.float32)
    attention_mask = ((1.0 - valid) * -10000.0).reshape(batch, 1, 1, seq)

    y = encoder_multiple_layers_forward(params, hidden_states, attention_mask)
    y = jax.block_until_ready(y)

    ref = encoder_ref(params, hidden_states, attention_mask)
    assert y.shape == ref.shape, f"shape mismatch {y.shape} vs {ref.shape}"
    assert jnp.allclose(y, ref, atol=1e-4, rtol=1e-4), (
        "mismatch vs reference; max abs diff = "
        f"{float(jnp.max(jnp.abs(y - ref)))}")

    print("KERNEL_OK")
</pallas_src>

<mosaic_0001>
module attributes {stable_mosaic.version = 11 : i64} {
  func.func @_dense_kernel(%arg0: i32, %arg1: memref<16x200xf32, #tpu.memory_space<vmem>>, %arg2: memref<200x600xf32, #tpu.memory_space<vmem>>, %arg3: memref<1x600xf32, #tpu.memory_space<vmem>>, %arg4: memref<16x600xf32, #tpu.memory_space<vmem>>) attributes {dimension_semantics = [#tpu.dimension_semantics<parallel>], iteration_bounds = array<i64: 1>, scalar_prefetch = 0 : i64, scratch_operands = 0 : i64, tpu.core_type = #tpu.core_type<tc>, window_params = [{transform_indices = @transform_0, window_bounds = array<i64: 16, 200>}, {pipeline_mode = #tpu.pipeline_mode<synchronous>, transform_indices = @transform_1, window_bounds = array<i64: 200, 600>}, {pipeline_mode = #tpu.pipeline_mode<synchronous>, transform_indices = @transform_2, window_bounds = array<i64: 1, 600>}, {transform_indices = @transform_3, window_bounds = array<i64: 16, 600>}]} {
    %c0 = arith.constant 0 : index
    %c0_0 = arith.constant 0 : index
    %0 = vector.load %arg1[%c0, %c0_0] : memref<16x200xf32, #tpu.memory_space<vmem>>, vector<16x200xf32>
    %c0_1 = arith.constant 0 : index
    %c0_2 = arith.constant 0 : index
    %1 = vector.load %arg2[%c0_1, %c0_2] : memref<200x600xf32, #tpu.memory_space<vmem>>, vector<200x600xf32>
    %c0_3 = arith.constant 0 : index
    %c0_4 = arith.constant 0 : index
    %2 = vector.load %arg3[%c0_3, %c0_4] : memref<1x600xf32, #tpu.memory_space<vmem>>, vector<1x600xf32>
    %cst = arith.constant dense<0.000000e+00> : vector<16x600xf32>
    %3 = tpu.matmul %0, %1, %cst {dimension_numbers = #tpu.dot_dimension_numbers<[1], [0], [0], [1], [0, 0, 1, 1], [], []>} : vector<16x200xf32>, vector<200x600xf32>, vector<16x600xf32> -> vector<16x600xf32>
    %4 = vector.broadcast %2 : vector<1x600xf32> to vector<16x600xf32>
    %5 = arith.addf %3, %4 : vector<16x600xf32>
    %c0_5 = arith.constant 0 : index
    %c0_6 = arith.constant 0 : index
    %6 = vector.load %arg4[%c0_5, %c0_6] : memref<16x600xf32, #tpu.memory_space<vmem>>, vector<16x600xf32>
    tpu.vector_store %arg4[%c0_5, %c0_6], %5 {strides = array<i32>} : memref<16x600xf32, #tpu.memory_space<vmem>>, vector<16x600xf32>,
    return
  }
  func.func @transform_0(%arg0: i32) -> (i32, i32) {
    %c0_i32 = arith.constant 0 : i32
    %c0_i32_0 = arith.constant 0 : i32
    return %arg0, %c0_i32 : i32, i32
  }
  func.func @transform_1(%arg0: i32) -> (i32, i32) {
    %c0_i32 = arith.constant 0 : i32
    %c0_i32_0 = arith.constant 0 : i32
    %c0_i32_1 = arith.constant 0 : i32
    return %c0_i32, %c0_i32_0 : i32, i32
  }
  func.func @transform_2(%arg0: i32) -> (i32, i32) {
    %c0_i32 = arith.constant 0 : i32
    %c0_i32_0 = arith.constant 0 : i32
    %c0_i32_1 = arith.constant 0 : i32
    return %c0_i32, %c0_i32_0 : i32, i32
  }
  func.func @transform_3(%arg0: i32) -> (i32, i32) {
    %c0_i32 = arith.constant 0 : i32
    %c0_i32_0 = arith.constant 0 : i32
    return %arg0, %c0_i32 : i32, i32
  }
}

</mosaic_0001>

<llo_original>
// kernel: tpu_custom_call.1
$region0: #{tpu_custom_call.1}
  #allocation0 [shape = 'u32[]', space=smem, size = 0x4, offset = 0x4, fixed_abs, tag = 'smem constant byte address 0x4 - core index']
  #allocation1 [shape = 'u32[144,128]{1,0:T(1,128)}', space=vmem, size = 0x12000, scoped, tag = 'internal scratch']
  %s0 = inlined_call_operand.hbm [shape: f32[16,200], index: 0, kind: input, shape index: {}]
  %s1 = inlined_call_operand.hbm [shape: f32[200,600], index: 1, kind: input, shape index: {}]
  %s2 = inlined_call_operand.vmem [shape: f32[1,600], index: 2, kind: input, shape index: {}]
  %s3 = inlined_call_operand.hbm [shape: f32[16,600], index: 3, kind: output, shape index: {}]
  %s4 = sld [smem:[#allocation0]]
  $region30: #{tpu_custom_call.1} parent=0
    _
  %s6 = ssub.s32 1, %s4
  %s7 = scalar_select 0, %s6, %s4
  $region1: #{tpu_custom_call.1} parent=0
    #allocation2 [shape = 'u8[16384]{0}', space=vmem, size = 0x4000, scoped, tag = 'input window, operand 0, single buffered']
    #allocation3 [shape = 's32[1]{0}', space=sflag, size = 0x4, scoped, tag = 'scoped memory for tpu_custom_call.1']
    #allocation4 [shape = 's32[1]{0}', space=sflag, size = 0x4, scoped, tag = 'scoped memory for tpu_custom_call.1']
    #allocation5 [shape = 'u8[512000]{0}', space=vmem, size = 0x7d000, scoped, tag = 'input window, operand 1, single buffered']
    #allocation6 [shape = 's32[1]{0}', space=sflag, size = 0x4, scoped, tag = 'scoped memory for tpu_custom_call.1']
    #allocation7 [shape = 'u8[40960]{0}', space=vmem, size = 0xa000, scoped, tag = 'output window, operand 0, single buffered']
    %8 = vsyncpa [#allocation3], 0
    %9 = vsyncpa [#allocation6], 0
    %10 = vsyncpa [#allocation4], 0
    // Predicated region
    $region2: #{tpu_custom_call.1} parent=1 // pred_check
      _
    $region3: #{tpu_custom_call.1} parent=1 // pred_check_branch
      %12 = sbr.rel (0) target = $region5
    $region4: #{tpu_custom_call.1} parent=1 // pred_region
      %s14 = ssub.s32 512, 512
      %15 = vsyncadd [#allocation3], %s14
      %s16 = sshll.u32 [#allocation2], 4
      %s17 = int_to_ptr.vmem [resolvable:$true] %s16
      %22 = dma.hbm_to_vmem [thread:$0]  %s0, 512, %s17, [#allocation3], 256, 256, 16
    $region5: #{tpu_custom_call.1} parent=1 // pred_fallthru
      _
    // Predicated region
    $region6: #{tpu_custom_call.1} parent=1 // pred_check
      _
    $region7: #{tpu_custom_call.1} parent=1 // pred_check_branch
      %24 = sbr.rel (0) target = $region9
    $region8: #{tpu_custom_call.1} parent=1 // pred_region
      %s26 = ssub.s32 16000, 16000
      %27 = vsyncadd [#allocation6], %s26
      %s28 = sshll.u32 [#allocation5], 4
      %s29 = int_to_ptr.vmem [resolvable:$true] %s28
      %34 = dma.hbm_to_vmem [thread:$0]  %s1, 16000, %s29, [#allocation6], 640, 640, 40
    $region9: #{tpu_custom_call.1} parent=1 // pred_fallthru
      _
    // Predicated region
    $region10: #{tpu_custom_call.1} parent=1 // pred_check
      _
    $region11: #{tpu_custom_call.1} parent=1 // pred_check_branch
      %36 = sbr.rel (0) target = $region13
    $region12: #{tpu_custom_call.1} parent=1 // pred_region
      _
    $region13: #{tpu_custom_call.1} parent=1 // pred_fallthru
      _
    // Predicated region
    $region14: #{tpu_custom_call.1} parent=1 // pred_check
      _
    $region15: #{tpu_custom_call.1} parent=1 // pred_check_branch
      %38 = sbr.rel (0) target = $region17
    $region16: #{tpu_custom_call.1} parent=1 // pred_region
      %39 = dma.done [#allocation3], 512
    $region17: #{tpu_custom_call.1} parent=1 // pred_fallthru
      _
    // Predicated region
    $region18: #{tpu_custom_call.1} parent=1 // pred_check
      _
    $region19: #{tpu_custom_call.1} parent=1 // pred_check_branch
      %41 = sbr.rel (0) target = $region21
    $region20: #{tpu_custom_call.1} parent=1 // pred_region
      %42 = dma.done [#allocation6], 16000
    $region21: #{tpu_custom_call.1} parent=1 // pred_fallthru
      _
    %v43 = vld [vmem:[#allocation2] sm:$0xff]
    %v44 = vld [vmem:[#allocation2 + $0x8] sm:$0xff]
    %v45 = vld [vmem:[#allocation2 + $0x10] sm:$0xff]
    %v46 = vld [vmem:[#allocation2 + $0x18] sm:$0xff]
    %v47 = vld [vmem:[#allocation5] sm:$0xff]
    %v48 = vld [vmem:[#allocation5 + $0x8] sm:$0xff]
    %v49 = vld [vmem:[#allocation5 + $0x10] sm:$0xff]
    %v50 = vld [vmem:[#allocation5 + $0x18] sm:$0xff]
    %v51 = vld [vmem:[#allocation5 + $0x20] sm:$0xff]
    %v52 = vld [vmem:[#allocation5 + $0x28] sm:$0xff]
    %v53 = vld [vmem:[#allocation5 + $0x30] sm:$0xff]
    %v54 = vld [vmem:[#allocation5 + $0x38] sm:$0xff]
    %v55 = vld [vmem:[#allocation5 + $0x40] sm:$0xff]
    %v56 = vld [vmem:[#allocation5 + $0x48] sm:$0xff]
    %v57 = vld [vmem:[#allocation5 + $0x50] sm:$0xff]
    %v58 = vld [vmem:[#allocation5 + $0x58] sm:$0xff]
    %v59 = vld [vmem:[#allocation5 + $0x60] sm:$0xff]
    %v60 = vld [vmem:[#allocation5 + $0x68] sm:$0xff]
    %v61 = vld [vmem:[#allocation5 + $0x70] sm:$0xff]
    %v62 = vld [vmem:[#allocation5 + $0x78] sm:$0xff]
    %v63 = vld [vmem:[#allocation5 + $0x80] sm:$0xff]
    %v64 = vld [vmem:[#allocation5 + $0x88] sm:$0xff]
    %v65 = vld [vmem:[#allocation5 + $0x90] sm:$0xff]
    %v66 = vld [vmem:[#allocation5 + $0x98] sm:$0xff]
    %v67 = vld [vmem:[#allocation5 + $0xa0] sm:$0xff]
    %v68 = vld [vmem:[#allocation5 + $0xa8] sm:$0xff]
    %v69 = vld [vmem:[#allocation5 + $0xb0] sm:$0xff]
    %v70 = vld [vmem:[#allocation5 + $0xb8] sm:$0xff]
    %v71 = vld [vmem:[#allocation5 + $0xc0] sm:$0xff]
    %v72 = vld [vmem:[#allocation5 + $0xc8] sm:$0xff]
    %v73 = vld [vmem:[#allocation5 + $0xd0] sm:$0xff]
    %v74 = vld [vmem:[#allocation5 + $0xd8] sm:$0xff]
    %v75 = vld [vmem:[#allocation5 + $0xe0] sm:$0xff]
    %v76 = vld [vmem:[#allocation5 + $0xe8] sm:$0xff]
    %v77 = vld [vmem:[#allocation5 + $0xf0] sm:$0xff]
    %v78 = vld [vmem:[#allocation5 + $0xf8] sm:$0xff]
    %v79 = vld [vmem:[#allocation5 + $0x100] sm:$0xff]
    %v80 = vld [vmem:[#allocation5 + $0x108] sm:$0xff]
    %v81 = vld [vmem:[#allocation5 + $0x110] sm:$0xff]
    %v82 = vld [vmem:[#allocation5 + $0x118] sm:$0xff]
    %v83 = vld [vmem:[#allocation5 + $0x120] sm:$0xff]
    %v84 = vld [vmem:[#allocation5 + $0x128] sm:$0xff]
    %v85 = vld [vmem:[#allocation5 + $0x130] sm:$0xff]
    %v86 = vld [vmem:[#allocation5 + $0x138] sm:$0xff]
    %v87 = vld [vmem:[#allocation5 + $0x140] sm:$0xff]
    %v88 = vld [vmem:[#allocation5 + $0x148] sm:$0xff]
    %v89 = vld [vmem:[#allocation5 + $0x150] sm:$0xff]
    %v90 = vld [vmem:[#allocation5 + $0x158] sm:$0xff]
    %v91 = vld [vmem:[#allocation5 + $0x160] sm:$0xff]
    %v92 = vld [vmem:[#allocation5 + $0x168] sm:$0xff]
    %v93 = vld [vmem:[#allocation5 + $0x170] sm:$0xff]
    %v94 = vld [vmem:[#allocation5 + $0x178] sm:$0xff]
    %v95 = vld [vmem:[#allocation5 + $0x180] sm:$0xff]
    %v96 = vld [vmem:[#allocation5 + $0x188] sm:$0xff]
    %v97 = vld [vmem:[#allocation5 + $0x190] sm:$0xff]
    %v98 = vld [vmem:[#allocation5 + $0x198] sm:$0xff]
    %v99 = vld [vmem:[#allocation5 + $0x1a0] sm:$0xff]
    %v100 = vld [vmem:[#allocation5 + $0x1a8] sm:$0xff]
    %v101 = vld [vmem:[#allocation5 + $0x1b0] sm:$0xff]
    %v102 = vld [vmem:[#allocation5 + $0x1b8] sm:$0xff]
    %v103 = vld [vmem:[#allocation5 + $0x1c0] sm:$0xff]
    %v104 = vld [vmem:[#allocation5 + $0x1c8] sm:$0xff]
    %v105 = vld [vmem:[#allocation5 + $0x1d0] sm:$0xff]
    %v106 = vld [vmem:[#allocation5 + $0x1d8] sm:$0xff]
    %v107 = vld [vmem:[#allocation5 + $0x1e0] sm:$0xff]
    %v108 = vld [vmem:[#allocation5 + $0x1e8] sm:$0xff]
    %v109 = vld [vmem:[#allocation5 + $0x1f0] sm:$0xff]
    %v110 = vld [vmem:[#allocation5 + $0x1f8] sm:$0xff]
    %v111 = vld [vmem:[#allocation5 + $0x200] sm:$0xff]
    %v112 = vld [vmem:[#allocation5 + $0x208] sm:$0xff]
    %v113 = vld [vmem:[#allocation5 + $0x210] sm:$0xff]
    %v114 = vld [vmem:[#allocation5 + $0x218] sm:$0xff]
    %v115 = vld [vmem:[#allocation5 + $0x220] sm:$0xff]
    %v116 = vld [vmem:[#allocation5 + $0x228] sm:$0xff]
    %v117 = vld [vmem:[#allocation5 + $0x230] sm:$0xff]
    %v118 = vld [vmem:[#allocation5 + $0x238] sm:$0xff]
    %v119 = vld [vmem:[#allocation5 + $0x240] sm:$0xff]
    %v120 = vld [vmem:[#allocation5 + $0x248] sm:$0xff]
    %v121 = vld [vmem:[#allocation5 + $0x250] sm:$0xff]
    %v122 = vld [vmem:[#allocation5 + $0x258] sm:$0xff]
    %v123 = vld [vmem:[#allocation5 + $0x260] sm:$0xff]
    %v124 = vld [vmem:[#allocation5 + $0x268] sm:$0xff]
    %v125 = vld [vmem:[#allocation5 + $0x270] sm:$0xff]
    %v126 = vld [vmem:[#allocation5 + $0x278] sm:$0xff]
    %v127 = vld [vmem:[#allocation5 + $0x280] sm:$0xff]
    %v128 = vld [vmem:[#allocation5 + $0x288] sm:$0xff]
    %v129 = vld [vmem:[#allocation5 + $0x290] sm:$0xff]
    %v130 = vld [vmem:[#allocation5 + $0x298] sm:$0xff]
    %v131 = vld [vmem:[#allocation5 + $0x2a0] sm:$0xff]
    %v132 = vld [vmem:[#allocation5 + $0x2a8] sm:$0xff]
    %v133 = vld [vmem:[#allocation5 + $0x2b0] sm:$0xff]
    %v134 = vld [vmem:[#allocation5 + $0x2b8] sm:$0xff]
    %v135 = vld [vmem:[#allocation5 + $0x2c0] sm:$0xff]
    %v136 = vld [vmem:[#allocation5 + $0x2c8] sm:$0xff]
    %v137 = vld [vmem:[#allocation5 + $0x2d0] sm:$0xff]
    %v138 = vld [vmem:[#allocation5 + $0x2d8] sm:$0xff]
    %v139 = vld [vmem:[#allocation5 + $0x2e0] sm:$0xff]
    %v140 = vld [vmem:[#allocation5 + $0x2e8] sm:$0xff]
    %v141 = vld [vmem:[#allocation5 + $0x2f0] sm:$0xff]
    %v142 = vld [vmem:[#allocation5 + $0x2f8] sm:$0xff]
    %v143 = vld [vmem:[#allocation5 + $0x300] sm:$0xff]
    %v144 = vld [vmem:[#allocation5 + $0x308] sm:$0xff]
    %v145 = vld [vmem:[#allocation5 + $0x310] sm:$0xff]
    %v146 = vld [vmem:[#allocation5 + $0x318] sm:$0xff]
    %v147 = vld [vmem:[#allocation5 + $0x320] sm:$0xff]
    %v148 = vld [vmem:[#allocation5 + $0x328] sm:$0xff]
    %v149 = vld [vmem:[#allocation5 + $0x330] sm:$0xff]
    %v150 = vld [vmem:[#allocation5 + $0x338] sm:$0xff]
    %v151 = vld [vmem:[#allocation5 + $0x340] sm:$0xff]
    %v152 = vld [vmem:[#allocation5 + $0x348] sm:$0xff]
    %v153 = vld [vmem:[#allocation5 + $0x350] sm:$0xff]
    %v154 = vld [vmem:[#allocation5 + $0x358] sm:$0xff]
    %v155 = vld [vmem:[#allocation5 + $0x360] sm:$0xff]
    %v156 = vld [vmem:[#allocation5 + $0x368] sm:$0xff]
    %v157 = vld [vmem:[#allocation5 + $0x370] sm:$0xff]
    %v158 = vld [vmem:[#allocation5 + $0x378] sm:$0xff]
    %v159 = vld [vmem:[#allocation5 + $0x380] sm:$0xff]
    %v160 = vld [vmem:[#allocation5 + $0x388] sm:$0xff]
    %v161 = vld [vmem:[#allocation5 + $0x390] sm:$0xff]
    %v162 = vld [vmem:[#allocation5 + $0x398] sm:$0xff]
    %v163 = vld [vmem:[#allocation5 + $0x3a0] sm:$0xff]
    %v164 = vld [vmem:[#allocation5 + $0x3a8] sm:$0xff]
    %v165 = vld [vmem:[#allocation5 + $0x3b0] sm:$0xff]
    %v166 = vld [vmem:[#allocation5 + $0x3b8] sm:$0xff]
    %v167 = vld [vmem:[#allocation5 + $0x3c0] sm:$0xff]
    %v168 = vld [vmem:[#allocation5 + $0x3c8] sm:$0xff]
    %v169 = vld [vmem:[#allocation5 + $0x3d0] sm:$0xff]
    %v170 = vld [vmem:[#allocation5 + $0x3d8] sm:$0xff]
    %v171 = vld [vmem:[#allocation5 + $0x3e0] sm:$0xff]
    %v172 = vld [vmem:[%s2] sm:$0x1f]
    %v174 = vlaneseq
    %v175 = vshrl.u32 %v174, 7
    %v176 = vsub.s32 0, %v175
    %v177 = vrot.slane %v172, %v176
    %v178 = vlaneseq
    %v179 = vshrl.u32 %v178, 7
    %v180 = vsub.s32 1, %v179
    %v181 = vrot.slane %v172, %v180
    %v182 = vlaneseq
    %v183 = vshrl.u32 %v182, 7
    %v184 = vsub.s32 2, %v183
    %v185 = vrot.slane %v172, %v184
    %v186 = vlaneseq
    %v187 = vshrl.u32 %v186, 7
    %v188 = vsub.s32 3, %v187
    %v189 = vrot.slane %v172, %v188
    %v190 = vlaneseq
    %v191 = vshrl.u32 %v190, 7
    %v192 = vsub.s32 4, %v191
    %v193 = vrot.slane %v172, %v192
    %vm199 = vcmask 588800
    %v201 = vsel %vm199, %v44, 0
    %v204 = vsel %vm199, %v46, 0
    %206 = vmatprep.subr.mxu0 %v48
    %207 = vmatpush1.msra.mxu0 %v47
    %208 = vmatprep.subr.mxu0 %v53
    %209 = vmatpush1.msra.mxu0 %v52
    %210 = vmatprep.subr.mxu0 %v58
    %211 = vmatpush1.msra.mxu0 %v57
    %212 = vmatprep.subr.mxu0 %v63
    %213 = vmatpush1.msra.mxu0 %v62
    %214 = vmatprep.subr.mxu0 %v68
    %215 = vmatpush1.msra.mxu0 %v67
    %216 = vmatprep.subr.mxu0 %v73
    %217 = vmatpush1.msra.mxu0 %v72
    %218 = vmatprep.subr.mxu0 %v78
    %219 = vmatpush1.msra.mxu0 %v77
    %220 = vmatprep.subr.mxu0 %v83
    %221 = vmatpush1.msra.mxu0 %v82
    %222 = vmatprep.subr.mxu0 %v88
    %223 = vmatpush1.msra.mxu0 %v87
    %224 = vmatprep.subr.mxu0 %v93
    %225 = vmatpush1.msra.mxu0 %v92
    %226 = vmatprep.subr.mxu0 %v98
    %227 = vmatpush1.msra.mxu0 %v97
    %228 = vmatprep.subr.mxu0 %v103
    %229 = vmatpush1.msra.mxu0 %v102
    %230 = vmatprep.subr.mxu0 %v108
    %231 = vmatpush1.msra.mxu0 %v107
    %232 = vmatprep.subr.mxu0 %v113
    %233 = vmatpush1.msra.mxu0 %v112
    %234 = vmatprep.subr.mxu0 %v118
    %235 = vmatpush1.msra.mxu0 %v117
    %236 = vmatprep.subr.mxu0 %v123
    %237 = vmatpush1.msra.mxu0 %v122
    %238 = vmatprep.subr.mxu0 %v128
    %239 = vmatpush1.msra.mxu0 %v127
    %240 = vmatprep.subr.mxu0 %v133
    %241 = vmatpush1.msra.mxu0 %v132
    %242 = vmatprep.subr.mxu0 %v138
    %243 = vmatpush1.msra.mxu0 %v137
    %244 = vmatprep.subr.mxu0 %v143
    %245 = vmatpush1.msra.mxu0 %v142
    %246 = vmatprep.subr.mxu0 %v148
    %247 = vmatpush1.msra.mxu0 %v147
    %248 = vmatprep.subr.mxu0 %v153
    %249 = vmatpush1.msra.mxu0 %v152
    %250 = vmatprep.subr.mxu0 %v158
    %251 = vmatpush1.msra.mxu0 %v157
    %252 = vmatprep.subr.mxu0 %v163
    %253 = vmatpush1.msra.mxu0 %v162
    %254 = vmatprep.subr.mxu0 %v168
    %255 = vmatpush1.msra.mxu0 %v167
    %256 = vmatprep.subr.mxu0 0.0
    %257 = vmatpush1.msra.mxu0 0.0
    %258 = vmatprep.subr.mxu0 0.0
    %259 = vmatpush1.msra.mxu0 0.0
    %260 = vmatprep.subr.mxu0 0.0
    %261 = vmatpush1.msra.mxu0 0.0
    %262 = vmatprep.subr.mxu0 0.0
    %263 = vmatpush1.msra.mxu0 0.0
    %264 = vmatprep.subr.mxu0 0.0
    %265 = vmatpush1.msra.mxu0 0.0
    %266 = vmatprep.subr.mxu0 0.0
    %267 = vmatpush1.msra.mxu0 0.0
    %268 = vmatprep.subr.mxu0 0.0
    %269 = vmatpush1.msra.mxu0 0.0
    %270 = vmatprep.mubr.f32.mxu0 %v201
    %271 = vmatmul.mubr.f32.gmra.mrb[0].mxu0 %v43
    %v272 = vpop.f32.mrb[0].mxu0
    %v273 = vadd.f32 %v177, %v272
    %v274 = vpop.f32.mrb[0].mxu0
    %v275 = vadd.f32 %v181, %v274
    %276 = vmatprep.mubr.f32.mxu0 %v204
    %277 = vmatmul.mubr.f32.gmra.mrb[0].mxu0 %v45
    %v278 = vpop.f32.mrb[0].mxu0
    %v279 = vadd.f32 %v177, %v278
    %v280 = vpop.f32.mrb[0].mxu0
    %v281 = vadd.f32 %v181, %v280
    %282 = vdwg.mxu0
    %283 = vmatprep.subr.mxu0 %v50
    %284 = vmatpush1.msra.mxu0 %v49
    %285 = vmatprep.subr.mxu0 %v55
    %286 = vmatpush1.msra.mxu0 %v54
    %287 = vmatprep.subr.mxu0 %v60
    %288 = vmatpush1.msra.mxu0 %v59
    %289 = vmatprep.subr.mxu0 %v65
    %290 = vmatpush1.msra.mxu0 %v64
    %291 = vmatprep.subr.mxu0 %v70
    %292 = vmatpush1.msra.mxu0 %v69
    %293 = vmatprep.subr.mxu0 %v75
    %294 = vmatpush1.msra.mxu0 %v74
    %295 = vmatprep.subr.mxu0 %v80
    %296 = vmatpush1.msra.mxu0 %v79
    %297 = vmatprep.subr.mxu0 %v85
    %298 = vmatpush1.msra.mxu0 %v84
    %299 = vmatprep.subr.mxu0 %v90
    %300 = vmatpush1.msra.mxu0 %v89
    %301 = vmatprep.subr.mxu0 %v95
    %302 = vmatpush1.msra.mxu0 %v94
    %303 = vmatprep.subr.mxu0 %v100
    %304 = vmatpush1.msra.mxu0 %v99
    %305 = vmatprep.subr.mxu0 %v105
    %306 = vmatpush1.msra.mxu0 %v104
    %307 = vmatprep.subr.mxu0 %v110
    %308 = vmatpush1.msra.mxu0 %v109
    %309 = vmatprep.subr.mxu0 %v115
    %310 = vmatpush1.msra.mxu0 %v114
    %311 = vmatprep.subr.mxu0 %v120
    %312 = vmatpush1.msra.mxu0 %v119
    %313 = vmatprep.subr.mxu0 %v125
    %314 = vmatpush1.msra.mxu0 %v124
    %315 = vmatprep.subr.mxu0 %v130
    %316 = vmatpush1.msra.mxu0 %v129
    %317 = vmatprep.subr.mxu0 %v135
    %318 = vmatpush1.msra.mxu0 %v134
    %319 = vmatprep.subr.mxu0 %v140
    %320 = vmatpush1.msra.mxu0 %v139
    %321 = vmatprep.subr.mxu0 %v145
    %322 = vmatpush1.msra.mxu0 %v144
    %323 = vmatprep.subr.mxu0 %v150
    %324 = vmatpush1.msra.mxu0 %v149
    %325 = vmatprep.subr.mxu0 %v155
    %326 = vmatpush1.msra.mxu0 %v154
    %327 = vmatprep.subr.mxu0 %v160
    %328 = vmatpush1.msra.mxu0 %v159
    %329 = vmatprep.subr.mxu0 %v165
    %330 = vmatpush1.msra.mxu0 %v164
    %331 = vmatprep.subr.mxu0 %v170
    %332 = vmatpush1.msra.mxu0 %v169
    %333 = vmatprep.subr.mxu0 0.0
    %334 = vmatpush1.msra.mxu0 0.0
    %335 = vmatprep.subr.mxu0 0.0
    %336 = vmatpush1.msra.mxu0 0.0
    %337 = vmatprep.subr.mxu0 0.0
    %338 = vmatpush1.msra.mxu0 0.0
    %339 = vmatprep.subr.mxu0 0.0
    %340 = vmatpush1.msra.mxu0 0.0
    %341 = vmatprep.subr.mxu0 0.0
    %342 = vmatpush1.msra.mxu0 0.0
    %343 = vmatprep.subr.mxu0 0.0
    %344 = vmatpush1.msra.mxu0 0.0
    %345 = vmatprep.subr.mxu0 0.0
    %346 = vmatpush1.msra.mxu0 0.0
    %347 = vmatprep.mubr.f32.mxu0 %v201
    %348 = vmatmul.mubr.f32.gmra.mrb[0].mxu0 %v43
    %v349 = vpop.f32.mrb[0].mxu0
    %v350 = vadd.f32 %v185, %v349
    %v351 = vpop.f32.mrb[0].mxu0
    %v352 = vadd.f32 %v189, %v351
    %353 = vmatprep.mubr.f32.mxu0 %v204
    %354 = vmatmul.mubr.f32.gmra.mrb[0].mxu0 %v45
    %v355 = vpop.f32.mrb[0].mxu0
    %v356 = vadd.f32 %v185, %v355
    %v357 = vpop.f32.mrb[0].mxu0
    %v358 = vadd.f32 %v189, %v357
    %359 = vdwg.mxu0
    %360 = vmatprep.subr.mxu0 0.0
    %361 = vmatpush1.msra.mxu0 %v51
    %362 = vmatprep.subr.mxu0 0.0
    %363 = vmatpush1.msra.mxu0 %v56
    %364 = vmatprep.subr.mxu0 0.0
    %365 = vmatpush1.msra.mxu0 %v61
    %366 = vmatprep.subr.mxu0 0.0
    %367 = vmatpush1.msra.mxu0 %v66
    %368 = vmatprep.subr.mxu0 0.0
    %369 = vmatpush1.msra.mxu0 %v71
    %370 = vmatprep.subr.mxu0 0.0
    %371 = vmatpush1.msra.mxu0 %v76
    %372 = vmatprep.subr.mxu0 0.0
    %373 = vmatpush1.msra.mxu0 %v81
    %374 = vmatprep.subr.mxu0 0.0
    %375 = vmatpush1.msra.mxu0 %v86
    %376 = vmatprep.subr.mxu0 0.0
    %377 = vmatpush1.msra.mxu0 %v91
    %378 = vmatprep.subr.mxu0 0.0
    %379 = vmatpush1.msra.mxu0 %v96
    %380 = vmatprep.subr.mxu0 0.0
    %381 = vmatpush1.msra.mxu0 %v101
    %382 = vmatprep.subr.mxu0 0.0
    %383 = vmatpush1.msra.mxu0 %v106
    %384 = vmatprep.subr.mxu0 0.0
    %385 = vmatpush1.msra.mxu0 %v111
    %386 = vmatprep.subr.mxu0 0.0
    %387 = vmatpush1.msra.mxu0 %v116
    %388 = vmatprep.subr.mxu0 0.0
    %389 = vmatpush1.msra.mxu0 %v121
    %390 = vmatprep.subr.mxu0 0.0
    %391 = vmatpush1.msra.mxu0 %v126
    %392 = vmatprep.subr.mxu0 0.0
    %393 = vmatpush1.msra.mxu0 %v131
    %394 = vmatprep.subr.mxu0 0.0
    %395 = vmatpush1.msra.mxu0 %v136
    %396 = vmatprep.subr.mxu0 0.0
    %397 = vmatpush1.msra.mxu0 %v141
    %398 = vmatprep.subr.mxu0 0.0
    %399 = vmatpush1.msra.mxu0 %v146
    %400 = vmatprep.subr.mxu0 0.0
    %401 = vmatpush1.msra.mxu0 %v151
    %402 = vmatprep.subr.mxu0 0.0
    %403 = vmatpush1.msra.mxu0 %v156
    %404 = vmatprep.subr.mxu0 0.0
    %405 = vmatpush1.msra.mxu0 %v161
    %406 = vmatprep.subr.mxu0 0.0
    %407 = vmatpush1.msra.mxu0 %v166
    %408 = vmatprep.subr.mxu0 0.0
    %409 = vmatpush1.msra.mxu0 %v171
    %410 = vmatprep.subr.mxu0 0.0
    %411 = vmatpush1.msra.mxu0 0.0
    %412 = vmatprep.subr.mxu0 0.0
    %413 = vmatpush1.msra.mxu0 0.0
    %414 = vmatprep.subr.mxu0 0.0
    %415 = vmatpush1.msra.mxu0 0.0
    %416 = vmatprep.subr.mxu0 0.0
    %417 = vmatpush1.msra.mxu0 0.0
    %418 = vmatprep.subr.mxu0 0.0
    %419 = vmatpush1.msra.mxu0 0.0
    %420 = vmatprep.subr.mxu0 0.0
    %421 = vmatpush1.msra.mxu0 0.0
    %422 = vmatprep.subr.mxu0 0.0
    %423 = vmatpush1.msra.mxu0 0.0
    %424 = vmatprep.mubr.f32.mxu0 %v201
    %425 = vmatmul.mubr.f32.gmra.mrb[0].mxu0 %v43
    %v426 = vpop.f32.mrb[0].mxu0
    %v427 = vadd.f32 %v193, %v426
    %v428 = vpop.f32.mrb[0].mxu0
    %429 = vmatprep.mubr.f32.mxu0 %v204
    %430 = vmatmul.mubr.f32.gmra.mrb[0].mxu0 %v45
    %v431 = vpop.f32.mrb[0].mxu0
    %v432 = vadd.f32 %v193, %v431
    %v433 = vpop.f32.mrb[0].mxu0
    %434 = vdwg.mxu0
    %435 = vst [vmem:[#allocation7] sm:$0xff] %v273
    %436 = vst [vmem:[#allocation7 + $0x8] sm:$0xff] %v275
    %437 = vst [vmem:[#allocation7 + $0x10] sm:$0xff] %v350
    %438 = vst [vmem:[#allocation7 + $0x18] sm:$0xff] %v352
    %vm439 = vcmask 719872
    %440 = vst.msk [vmem:[#allocation7 + $0x20] sm:$0xff] %vm439, %v427
    %441 = vst [vmem:[#allocation7 + $0x28] sm:$0xff] %v279
    %442 = vst [vmem:[#allocation7 + $0x30] sm:$0xff] %v281
    %443 = vst [vmem:[#allocation7 + $0x38] sm:$0xff] %v356
    %444 = vst [vmem:[#allocation7 + $0x40] sm:$0xff] %v358
    %445 = vst.msk [vmem:[#allocation7 + $0x48] sm:$0xff] %vm439, %v432
    // Predicated region
    $region22: #{tpu_custom_call.1} parent=1 // pred_check
      _
    $region23: #{tpu_custom_call.1} parent=1 // pred_check_branch
      %447 = sbr.rel (0) target = $region25
    $region24: #{tpu_custom_call.1} parent=1 // pred_region
      %s449 = ssub.s32 1280, 1280
      %450 = vsyncadd [#allocation4], %s449
      %s451 = sshll.u32 [#allocation7], 4
      %s452 = int_to_ptr.vmem [resolvable:$true] %s451
      %457 = dma.vmem_to_hbm [thread:$0]  %s452, 1280, %s3, [#allocation4], 640, 640, 40
    $region25: #{tpu_custom_call.1} parent=1 // pred_fallthru
      _
    // Predicated region
    $region26: #{tpu_custom_call.1} parent=1 // pred_check
      _
    $region27: #{tpu_custom_call.1} parent=1 // pred_check_branch
      %459 = sbr.rel (0) target = $region29
    $region28: #{tpu_custom_call.1} parent=1 // pred_region
      %460 = dma.done [#allocation4], 1280
    $region29: #{tpu_custom_call.1} parent=1 // pred_fallthru
      _
    %461 = vsyncpa [#allocation3], 1
    %462 = vsyncpa [#allocation6], 1
    %463 = vsyncpa [#allocation4], 1

</llo_original>
